<compile_context>
chip_gen: v7x
topology: tpu7x:2x2x1
jax: 0.10.0
libtpu: 0.0.40
codegen_flags: <defaults>
</compile_context>

<pallas_src>
import jax
import jax.numpy as jnp
from jax.experimental import pallas as pl
from jax.experimental.pallas import tpu as pltpu


def _round_up(x, m):
    return (x + m - 1) // m * m


# --------------------------------------------------------------------------
# Kernel: fused one-hot embedding+input-projection gather + one GRU step.
# --------------------------------------------------------------------------
def encoder_gru_kernel(tok_ref, xw_ref, wh_ref, bh_ref, h_ref, out_ref):
    """
    tok_ref : VMEM (B, 1)   int32 token ids (padded batch)
    xw_ref  : VMEM (V, 3H)  f32   emb @ [W_ir^T|W_iz^T|W_in^T] + b_ih
    wh_ref  : VMEM (H, 3H)  bf16  [W_hr^T | W_hz^T | W_hn^T]
    bh_ref  : VMEM (1, 3H)  f32   b_hh
    h_ref   : VMEM (B, H)   f32   previous hidden state
    out_ref : VMEM (B, H)   f32   new hidden state (aliases h's HBM buffer)
    """
    B, H = h_ref.shape
    V = xw_ref.shape[0]

    # One-hot MXU "gather" of the pre-folded input projection.  Rides the MXU
    # instead of B per-row dynamic slices + sublane concat; OOB tokens select
    # an all-zero row (benign) instead of reading adjacent VMEM.
    tok = tok_ref[...]                                                    # (B, 1) int32
    onehot = (tok == jax.lax.broadcasted_iota(jnp.int32, (B, V), 1)
              ).astype(jnp.float32)                                       # (B, V)
    gx = jnp.dot(onehot, xw_ref[...],
                 preferred_element_type=jnp.float32)                      # (B,3H)=[i_r|i_z|i_n]

    h = h_ref[...]                                                        # (B, H) f32
    gh = jnp.dot(h.astype(jnp.bfloat16), wh_ref[...],
                 preferred_element_type=jnp.float32) + bh_ref[...]        # (B,3H)=[h_r|h_z|h_n]

    # Gate math in f32 (PyTorch nn.GRU semantics: b_hn stays inside r*(...)).
    r = jax.nn.sigmoid(gx[:, 0 * H:1 * H] + gh[:, 0 * H:1 * H])
    z = jax.nn.sigmoid(gx[:, 1 * H:2 * H] + gh[:, 1 * H:2 * H])
    n = jnp.tanh(gx[:, 2 * H:3 * H] + r * gh[:, 2 * H:3 * H])
    out_ref[...] = ((1.0 - z) * n + z * h).astype(out_ref.dtype)


# --------------------------------------------------------------------------
# One-time parameter preprocessing (fold / transpose / cast OUT of hot path).
# --------------------------------------------------------------------------
def make_raw_params(key, input_size, hidden_size):
    """Synthetic parameters with the same shapes/layout as the torch module."""
    H = hidden_size
    k = 1.0 / float(H) ** 0.5
    k0, k1, k2, k3, k4 = jax.random.split(key, 5)
    return {
        "embedding": jax.random.normal(k0, (input_size, H), jnp.float32),
        "w_ih": jax.random.uniform(k1, (3 * H, H), jnp.float32, -k, k),  # [W_ir; W_iz; W_in]
        "w_hh": jax.random.uniform(k2, (3 * H, H), jnp.float32, -k, k),  # [W_hr; W_hz; W_hn]
        "b_ih": jax.random.uniform(k3, (3 * H,), jnp.float32, -k, k),
        "b_hh": jax.random.uniform(k4, (3 * H,), jnp.float32, -k, k),
    }


def pack_params(raw):
    """Build kernel-ready params: folded input table + transposed hidden weight."""
    emb = raw["embedding"].astype(jnp.float32)          # (V, H)
    w_ih = raw["w_ih"].astype(jnp.float32)              # (3H, H)
    w_hh = raw["w_hh"].astype(jnp.float32)              # (3H, H)
    b_ih = raw["b_ih"].astype(jnp.float32)              # (3H,)
    b_hh = raw["b_hh"].astype(jnp.float32)              # (3H,)
    H3 = w_ih.shape[0]
    return {
        # Embedding folded into the input projection (+ input bias): f32 so the
        # one-hot row-select in the kernel is exact.
        "xw_table": emb @ w_ih.T + b_ih[None, :],       # (V, 3H) f32
        "w_h": w_hh.T.astype(jnp.bfloat16),             # (H, 3H) bf16  [r | z | n]
        "b_h": b_hh.reshape(1, H3),                     # (1, 3H) f32
    }


# --------------------------------------------------------------------------
# Hot-path step: padded layout in, padded layout out (no pad/slice XLA ops).
# --------------------------------------------------------------------------
@jax.jit
def encoder_step_padded(params, tok_pad, h_pad):
    """
    tok_pad : (B_pad, 1) int32
    h_pad   : (B_pad, H) f32
    returns : (B_pad, H) f32 new hidden state
    """
    xw = params["xw_table"]
    wh = params["w_h"]
    bh = params["b_h"]
    V, H3 = xw.shape
    H = H3 // 3
    B_pad = h_pad.shape[0]

    return pl.pallas_call(
        encoder_gru_kernel,
        out_shape=jax.ShapeDtypeStruct((B_pad, H), jnp.float32),
        grid=(1,),
        in_specs=[
            pl.BlockSpec((B_pad, 1), lambda i: (0, 0)),   # tokens
            pl.BlockSpec((V, H3), lambda i: (0, 0)),      # folded input table
            pl.BlockSpec((H, H3), lambda i: (0, 0)),      # hidden weight (bf16)
            pl.BlockSpec((1, H3), lambda i: (0, 0)),      # hidden bias
            pl.BlockSpec((B_pad, H), lambda i: (0, 0)),   # previous hidden
        ],
        out_specs=pl.BlockSpec((B_pad, H), lambda i: (0, 0)),
        # In-place hidden update: h_pad (operand 4) aliases the output buffer.
        input_output_aliases={4: 0},
        compiler_params=pltpu.CompilerParams(dimension_semantics=("arbitrary",)),
    )(tok_pad, xw, wh, bh, h_pad)


# --------------------------------------------------------------------------
# Module-faithful forward (mirrors EncoderRNN.forward).
# --------------------------------------------------------------------------
def encoder_forward(params, tokens, hidden):
    """
    tokens : (B,)      int token ids
    hidden : (1, B, H) float32
    returns (output (1,B,H), hidden (1,B,H)) -- identical values, as in a
    single-layer single-step PyTorch GRU.

    NOTE: in a real per-timestep decode loop, pad once and call
    `encoder_step_padded` directly (see __main__) to keep pad/slice ops out of
    the hot path.
    """
    H = hidden.shape[-1]
    B = tokens.shape[0]
    B_pad = _round_up(B, 16)                           # full bf16 sublane tile

    tok_pad = jnp.zeros((B_pad, 1), jnp.int32).at[:B, 0].set(tokens.astype(jnp.int32))
    h_pad = jnp.zeros((B_pad, H), jnp.float32).at[:B].set(hidden[0].astype(jnp.float32))

    new_h = encoder_step_padded(params, tok_pad, h_pad)
    out = new_h[:B].reshape(1, B, H)
    return out, out


def init_hidden(batch_size, hidden_size):
    return jnp.zeros((1, batch_size, hidden_size), jnp.float32)


# --------------------------------------------------------------------------
# Pure-JAX f32 reference (exact PyTorch nn.GRU semantics) for validation.
# --------------------------------------------------------------------------
def reference_forward(raw, tokens, hidden):
    H = raw["embedding"].shape[1]
    B = tokens.shape[0]
    x = jnp.take(raw["embedding"], tokens, axis=0)
    h = hidden[0]
    gi = x @ raw["w_ih"].T + raw["b_ih"]
    gh = h @ raw["w_hh"].T + raw["b_hh"]
    i_r, i_z, i_n = gi[:, :H], gi[:, H:2 * H], gi[:, 2 * H:]
    h_r, h_z, h_n = gh[:, :H], gh[:, H:2 * H], gh[:, 2 * H:]
    r = jax.nn.sigmoid(i_r + h_r)
    z = jax.nn.sigmoid(i_z + h_z)
    n = jnp.tanh(i_n + r * h_n)
    new_h = (1.0 - z) * n + z * h
    out = new_h.reshape(1, B, H)
    return out, out


if __name__ == "__main__":
    input_size = 16        # vocab size
    hidden_size = 256      # matches the torch module's hidden_size
    batch_size = 4
    seq_len = 3

    key = jax.random.PRNGKey(0)
    pkey, tkey = jax.random.split(key)
    raw = make_raw_params(pkey, input_size, hidden_size)
    params = pack_params(raw)

    tokens_seq = jax.random.randint(tkey, (seq_len, batch_size), 0, input_size,
                                    dtype=jnp.int32)
    hidden0 = init_hidden(batch_size, hidden_size)

    # ---- 1) Module-faithful single forward call ----------------------------
    output, new_hidden = encoder_forward(params, tokens_seq[0], hidden0)
    jax.block_until_ready((output, new_hidden))
    assert output.shape == (1, batch_size, hidden_size)
    assert new_hidden.shape == (1, batch_size, hidden_size)

    ref_out, _ = reference_forward(raw, tokens_seq[0], hidden0)
    err1 = float(jnp.max(jnp.abs(output - ref_out)))
    assert err1 < 5e-2, f"single-step max abs error vs reference: {err1}"

    # ---- 2) Hot-loop style: pad once, keep hidden padded across steps ------
    B_pad = _round_up(batch_size, 16)
    tok_pad_seq = jnp.zeros((seq_len, B_pad, 1), jnp.int32)
    tok_pad_seq = tok_pad_seq.at[:, :batch_size, 0].set(tokens_seq)
    h_pad = jnp.zeros((B_pad, hidden_size), jnp.float32).at[:batch_size].set(hidden0[0])

    ref_h = hidden0
    for t in range(seq_len):
        h_pad = encoder_step_padded(params, tok_pad_seq[t], h_pad)
        _, ref_h = reference_forward(raw, tokens_seq[t], ref_h)
    jax.block_until_ready(h_pad)

    err2 = float(jnp.max(jnp.abs(h_pad[:batch_size] - ref_h[0])))
    assert err2 < 5e-2, f"multi-step max abs error vs reference: {err2}"

    print("KERNEL_OK")
</pallas_src>

<mosaic_0001>
module attributes {stable_mosaic.version = 11 : i64} {
  func.func @encoder_gru_kernel(%arg0: i32, %arg1: memref<16x1xi32, #tpu.memory_space<vmem>>, %arg2: memref<16x768xf32, #tpu.memory_space<vmem>>, %arg3: memref<256x768xbf16, #tpu.memory_space<vmem>>, %arg4: memref<1x768xf32, #tpu.memory_space<vmem>>, %arg5: memref<16x256xf32, #tpu.memory_space<vmem>>, %arg6: memref<16x256xf32, #tpu.memory_space<vmem>>) attributes {dimension_semantics = [#tpu.dimension_semantics<arbitrary>], iteration_bounds = array<i64: 1>, scalar_prefetch = 0 : i64, scratch_operands = 0 : i64, tpu.core_type = #tpu.core_type<tc>, window_params = [{pipeline_mode = #tpu.pipeline_mode<synchronous>, transform_indices = @transform_0, window_bounds = array<i64: 16, 1>}, {pipeline_mode = #tpu.pipeline_mode<synchronous>, transform_indices = @transform_1, window_bounds = array<i64: 16, 768>}, {pipeline_mode = #tpu.pipeline_mode<synchronous>, transform_indices = @transform_2, window_bounds = array<i64: 256, 768>}, {pipeline_mode = #tpu.pipeline_mode<synchronous>, transform_indices = @transform_3, window_bounds = array<i64: 1, 768>}, {pipeline_mode = #tpu.pipeline_mode<synchronous>, transform_indices = @transform_4, window_bounds = array<i64: 16, 256>}, {pipeline_mode = #tpu.pipeline_mode<synchronous>, transform_indices = @transform_5, window_bounds = array<i64: 16, 256>}]} {
    %c0 = arith.constant 0 : index
    %c0_0 = arith.constant 0 : index
    %0 = vector.load %arg1[%c0, %c0_0] : memref<16x1xi32, #tpu.memory_space<vmem>>, vector<16x1xi32>
    %1 = tpu.iota {dimensions = array<i32: 1>} : vector<16x16xi32>
    %2 = vector.broadcast %0 : vector<16x1xi32> to vector<16x16xi32>
    %3 = arith.cmpi eq, %2, %1 : vector<16x16xi32>
    %4 = arith.extui %3 : vector<16x16xi1> to vector<16x16xi32>
    %5 = arith.sitofp %4 : vector<16x16xi32> to vector<16x16xf32>
    %c0_1 = arith.constant 0 : index
    %c0_2 = arith.constant 0 : index
    %6 = vector.load %arg2[%c0_1, %c0_2] : memref<16x768xf32, #tpu.memory_space<vmem>>, vector<16x768xf32>
    %cst = arith.constant dense<0.000000e+00> : vector<16x768xf32>
    %7 = tpu.matmul %5, %6, %cst {dimension_numbers = #tpu.dot_dimension_numbers<[1], [0], [0], [1], [0, 0, 1, 1], [], []>} : vector<16x16xf32>, vector<16x768xf32>, vector<16x768xf32> -> vector<16x768xf32>
    %c0_3 = arith.constant 0 : index
    %c0_4 = arith.constant 0 : index
    %8 = vector.load %arg5[%c0_3, %c0_4] : memref<16x256xf32, #tpu.memory_space<vmem>>, vector<16x256xf32>
    %9 = arith.truncf %8 : vector<16x256xf32> to vector<16x256xbf16>
    %c0_5 = arith.constant 0 : index
    %c0_6 = arith.constant 0 : index
    %10 = vector.load %arg3[%c0_5, %c0_6] : memref<256x768xbf16, #tpu.memory_space<vmem>>, vector<256x768xbf16>
    %cst_7 = arith.constant dense<0.000000e+00> : vector<16x768xf32>
    %11 = tpu.matmul %9, %10, %cst_7 {dimension_numbers = #tpu.dot_dimension_numbers<[1], [0], [0], [1], [0, 0, 1, 1], [], []>} : vector<16x256xbf16>, vector<256x768xbf16>, vector<16x768xf32> -> vector<16x768xf32>
    %c0_8 = arith.constant 0 : index
    %c0_9 = arith.constant 0 : index
    %12 = vector.load %arg4[%c0_8, %c0_9] : memref<1x768xf32, #tpu.memory_space<vmem>>, vector<1x768xf32>
    %13 = vector.broadcast %12 : vector<1x768xf32> to vector<16x768xf32>
    %14 = arith.addf %11, %13 : vector<16x768xf32>
    %15 = vector.extract_strided_slice %7 {offsets = [0, 0], sizes = [16, 256], strides = [1, 1]} : vector<16x768xf32> to vector<16x256xf32>
    %16 = vector.extract_strided_slice %14 {offsets = [0, 0], sizes = [16, 256], strides = [1, 1]} : vector<16x768xf32> to vector<16x256xf32>
    %17 = arith.addf %15, %16 : vector<16x256xf32>
    %18 = arith.negf %17 : vector<16x256xf32>
    %19 = math.exp %18 : vector<16x256xf32>
    %cst_10 = arith.constant 1.000000e+00 : f32
    %20 = vector.broadcast %cst_10 : f32 to vector<16x256xf32>
    %21 = arith.addf %20, %19 : vector<16x256xf32>
    %22 = arith.divf %20, %21 : vector<16x256xf32>
    %23 = vector.extract_strided_slice %7 {offsets = [0, 256], sizes = [16, 256], strides = [1, 1]} : vector<16x768xf32> to vector<16x256xf32>
    %24 = vector.extract_strided_slice %14 {offsets = [0, 256], sizes = [16, 256], strides = [1, 1]} : vector<16x768xf32> to vector<16x256xf32>
    %25 = arith.addf %23, %24 : vector<16x256xf32>
    %26 = arith.negf %25 : vector<16x256xf32>
    %27 = math.exp %26 : vector<16x256xf32>
    %cst_11 = arith.constant 1.000000e+00 : f32
    %28 = vector.broadcast %cst_11 : f32 to vector<16x256xf32>
    %29 = arith.addf %28, %27 : vector<16x256xf32>
    %30 = arith.divf %28, %29 : vector<16x256xf32>
    %31 = vector.extract_strided_slice %7 {offsets = [0, 512], sizes = [16, 256], strides = [1, 1]} : vector<16x768xf32> to vector<16x256xf32>
    %32 = vector.extract_strided_slice %14 {offsets = [0, 512], sizes = [16, 256], strides = [1, 1]} : vector<16x768xf32> to vector<16x256xf32>
    %33 = arith.mulf %22, %32 : vector<16x256xf32>
    %34 = arith.addf %31, %33 : vector<16x256xf32>
    %35 = math.tanh %34 : vector<16x256xf32>
    %cst_12 = arith.constant 1.000000e+00 : f32
    %36 = vector.broadcast %cst_12 : f32 to vector<16x256xf32>
    %37 = arith.subf %36, %30 : vector<16x256xf32>
    %38 = arith.mulf %37, %35 : vector<16x256xf32>
    %39 = arith.mulf %30, %8 : vector<16x256xf32>
    %40 = arith.addf %38, %39 : vector<16x256xf32>
    %c0_13 = arith.constant 0 : index
    %c0_14 = arith.constant 0 : index
    %41 = vector.load %arg6[%c0_13, %c0_14] : memref<16x256xf32, #tpu.memory_space<vmem>>, vector<16x256xf32>
    tpu.vector_store %arg6[%c0_13, %c0_14], %40 {strides = array<i32>} : memref<16x256xf32, #tpu.memory_space<vmem>>, vector<16x256xf32>,
    return
  }
  func.func @transform_0(%arg0: i32) -> (i32, i32) {
    %c0_i32 = arith.constant 0 : i32
    %c0_i32_0 = arith.constant 0 : i32
    %c0_i32_1 = arith.constant 0 : i32
    return %c0_i32, %c0_i32_0 : i32, i32
  }
  func.func @transform_1(%arg0: i32) -> (i32, i32) {
    %c0_i32 = arith.constant 0 : i32
    %c0_i32_0 = arith.constant 0 : i32
    %c0_i32_1 = arith.constant 0 : i32
    return %c0_i32, %c0_i32_0 : i32, i32
  }
  func.func @transform_2(%arg0: i32) -> (i32, i32) {
    %c0_i32 = arith.constant 0 : i32
    %c0_i32_0 = arith.constant 0 : i32
    %c0_i32_1 = arith.constant 0 : i32
    return %c0_i32, %c0_i32_0 : i32, i32
  }
  func.func @transform_3(%arg0: i32) -> (i32, i32) {
    %c0_i32 = arith.constant 0 : i32
    %c0_i32_0 = arith.constant 0 : i32
    %c0_i32_1 = arith.constant 0 : i32
    return %c0_i32, %c0_i32_0 : i32, i32
  }
  func.func @transform_4(%arg0: i32) -> (i32, i32) {
    %c0_i32 = arith.constant 0 : i32
    %c0_i32_0 = arith.constant 0 : i32
    %c0_i32_1 = arith.constant 0 : i32
    return %c0_i32, %c0_i32_0 : i32, i32
  }
  func.func @transform_5(%arg0: i32) -> (i32, i32) {
    %c0_i32 = arith.constant 0 : i32
    %c0_i32_0 = arith.constant 0 : i32
    %c0_i32_1 = arith.constant 0 : i32
    return %c0_i32, %c0_i32_0 : i32, i32
  }
}

</mosaic_0001>

<llo_original>
// kernel: encoder_step_padded.1
$region0: #{encoder_step_padded.1}
  #allocation0 [shape = 'u32[]', space=smem, size = 0x4, offset = 0x4, fixed_abs, tag = 'smem constant byte address 0x4 - core index']
  #allocation1 [shape = 'u32[144,128]{1,0:T(1,128)}', space=vmem, size = 0x12000, scoped, tag = 'internal scratch']
  %s0 = inlined_call_operand.vmem [shape: s32[16,1], index: 0, kind: input, shape index: {}]
  %s1 = inlined_call_operand.hbm [shape: f32[16,768], index: 1, kind: input, shape index: {}]
  %s2 = inlined_call_operand.hbm [shape: bf16[256,768], index: 2, kind: input, shape index: {}]
  %s3 = inlined_call_operand.vmem [shape: f32[1,768], index: 3, kind: input, shape index: {}]
  %s4 = inlined_call_operand.hbm [shape: f32[16,256], index: 4, kind: input, shape index: {}, may-alias: {4,5}]
  %s5 = inlined_call_operand.hbm [shape: f32[16,256], index: 5, kind: output, shape index: {}, may-alias: {4,5}]
  %s6 = sld [smem:[#allocation0]]
  $region42: #{encoder_step_padded.1} parent=0
    _
  %s8 = ssub.s32 1, %s6
  %s9 = scalar_select 0, %s8, %s6
  $region1: #{encoder_step_padded.1} parent=0
    #allocation2 [shape = 'u8[49152]{0}', space=vmem, size = 0xc000, scoped, tag = 'input window, operand 1, single buffered']
    #allocation3 [shape = 's32[1]{0}', space=sflag, size = 0x4, scoped, tag = 'scoped memory for encoder_step_padded.1']
    #allocation4 [shape = 's32[1]{0}', space=sflag, size = 0x4, scoped, tag = 'scoped memory for encoder_step_padded.1']
    #allocation5 [shape = 'u8[393216]{0}', space=vmem, size = 0x60000, scoped, tag = 'input window, operand 2, single buffered']
    #allocation6 [shape = 's32[1]{0}', space=sflag, size = 0x4, scoped, tag = 'scoped memory for encoder_step_padded.1']
    #allocation7 [shape = 'u8[16384]{0}', space=vmem, size = 0x4000, scoped, tag = 'input window, operand 4, single buffered']
    #allocation8 [shape = 'u8[16384]{0}', space=vmem, size = 0x4000, scoped, tag = 'output window, operand 0, single buffered']
    %10 = vsyncpa [#allocation3], 0
    %11 = vsyncpa [#allocation6], 0
    %12 = vsyncpa [#allocation4], 0
    // Predicated region
    $region2: #{encoder_step_padded.1} parent=1 // pred_check
      _
    $region3: #{encoder_step_padded.1} parent=1 // pred_check_branch
      %14 = sbr.rel (0) target = $region5
    $region4: #{encoder_step_padded.1} parent=1 // pred_region
      _
    $region5: #{encoder_step_padded.1} parent=1 // pred_fallthru
      _
    // Predicated region
    $region6: #{encoder_step_padded.1} parent=1 // pred_check
      _
    $region7: #{encoder_step_padded.1} parent=1 // pred_check_branch
      %16 = sbr.rel (0) target = $region9
    $region8: #{encoder_step_padded.1} parent=1 // pred_region
      %s18 = ssub.s32 1536, 1536
      %19 = vsyncadd [#allocation3], %s18
      %s20 = sshll.u32 [#allocation2], 4
      %s21 = int_to_ptr.vmem [resolvable:$true] %s20
      %26 = dma.hbm_to_vmem [thread:$0]  %s1, 1536, %s21, [#allocation3], 768, 768, 48
    $region9: #{encoder_step_padded.1} parent=1 // pred_fallthru
      _
    // Predicated region
    $region10: #{encoder_step_padded.1} parent=1 // pred_check
      _
    $region11: #{encoder_step_padded.1} parent=1 // pred_check_branch
      %28 = sbr.rel (0) target = $region13
    $region12: #{encoder_step_padded.1} parent=1 // pred_region
      %s30 = ssub.s32 12288, 12288
      %31 = vsyncadd [#allocation6], %s30
      %s32 = sshll.u32 [#allocation5], 4
      %s33 = int_to_ptr.vmem [resolvable:$true] %s32
      %38 = dma.hbm_to_vmem [thread:$0]  %s2, 12288, %s33, [#allocation6], 384, 384, 24
    $region13: #{encoder_step_padded.1} parent=1 // pred_fallthru
      _
    // Predicated region
    $region14: #{encoder_step_padded.1} parent=1 // pred_check
      _
    $region15: #{encoder_step_padded.1} parent=1 // pred_check_branch
      %40 = sbr.rel (0) target = $region17
    $region16: #{encoder_step_padded.1} parent=1 // pred_region
      _
    $region17: #{encoder_step_padded.1} parent=1 // pred_fallthru
      _
    // Predicated region
    $region18: #{encoder_step_padded.1} parent=1 // pred_check
      _
    $region19: #{encoder_step_padded.1} parent=1 // pred_check_branch
      %42 = sbr.rel (0) target = $region21
    $region20: #{encoder_step_padded.1} parent=1 // pred_region
      %s44 = ssub.s32 512, 512
      %45 = vsyncadd [#allocation6], %s44
      %s46 = sshll.u32 [#allocation7], 4
      %s47 = int_to_ptr.vmem [resolvable:$true] %s46
      %52 = dma.hbm_to_vmem [thread:$0]  %s4, 512, %s47, [#allocation6], 256, 256, 16
    $region21: #{encoder_step_padded.1} parent=1 // pred_fallthru
      _
    // Predicated region
    $region22: #{encoder_step_padded.1} parent=1 // pred_check
      _
    $region23: #{encoder_step_padded.1} parent=1 // pred_check_branch
      %54 = sbr.rel (0) target = $region25
    $region24: #{encoder_step_padded.1} parent=1 // pred_region
      %55 = dma.done [#allocation3], 1536
    $region25: #{encoder_step_padded.1} parent=1 // pred_fallthru
      _
    // Predicated region
    $region26: #{encoder_step_padded.1} parent=1 // pred_check
      _
    $region27: #{encoder_step_padded.1} parent=1 // pred_check_branch
      %57 = sbr.rel (0) target = $region29
    $region28: #{encoder_step_padded.1} parent=1 // pred_region
      %58 = dma.done [#allocation6], 12288
    $region29: #{encoder_step_padded.1} parent=1 // pred_fallthru
      _
    // Predicated region
    $region30: #{encoder_step_padded.1} parent=1 // pred_check
      _
    $region31: #{encoder_step_padded.1} parent=1 // pred_check_branch
      %60 = sbr.rel (0) target = $region33
    $region32: #{encoder_step_padded.1} parent=1 // pred_region
      %61 = dma.done [#allocation6], 512
    $region33: #{encoder_step_padded.1} parent=1 // pred_fallthru
      _
    %v62 = vld [vmem:[%s0] sm:$0xff]
    %v63 = vld [vmem:[%s0 + $0x8] sm:$0xff]
    %v64 = vlaneseq
    %v65 = vand.u32 %v64, 127
    %66 = vset.pattern.permute.xlu0 0
    %67 = vperm.xlu0 %66, %v62
    %v68 = vpop.permute.xlu0 %67
    %69 = vset.pattern.permute.xlu0 0
    %70 = vperm.xlu0 %69, %v63
    %v71 = vpop.permute.xlu0 %70
    %vm72 = vcmp.eq.s32.totalorder %v68, %v65
    %vm73 = vcmp.eq.s32.totalorder %v71, %v65
    %v74 = vsel %vm72, 1, 0
    %v75 = vsel %vm73, 1, 0
    %v76 = vcvt.s32.f32 %v74
    %v77 = vcvt.s32.f32 %v75
    %v78 = vld [vmem:[#allocation2] sm:$0xff]
    %v79 = vld [vmem:[#allocation2 + $0x8] sm:$0xff]
    %v80 = vld [vmem:[#allocation2 + $0x10] sm:$0xff]
    %v81 = vld [vmem:[#allocation2 + $0x18] sm:$0xff]
    %v82 = vld [vmem:[#allocation2 + $0x20] sm:$0xff]
    %v83 = vld [vmem:[#allocation2 + $0x28] sm:$0xff]
    %v84 = vld [vmem:[#allocation2 + $0x30] sm:$0xff]
    %v85 = vld [vmem:[#allocation2 + $0x38] sm:$0xff]
    %v86 = vld [vmem:[#allocation2 + $0x40] sm:$0xff]
    %v87 = vld [vmem:[#allocation2 + $0x48] sm:$0xff]
    %v88 = vld [vmem:[#allocation2 + $0x50] sm:$0xff]
    %v89 = vld [vmem:[#allocation2 + $0x58] sm:$0xff]
    %vm90 = vcmask 130048
    %v92 = vsel %vm90, %v76, 0
    %v95 = vsel %vm90, %v77, 0
    %97 = vmatprep.subr.mxu0 %v79
    %98 = vmatpush1.msra.mxu0 %v78
    %99 = vmatprep.subr.mxu0 %v85
    %100 = vmatpush1.msra.mxu0 %v84
    %101 = vmatprep.subr.mxu0 0.0
    %102 = vmatpush1.msra.mxu0 0.0
    %103 = vmatprep.subr.mxu0 0.0
    %104 = vmatpush1.msra.mxu0 0.0
    %105 = vmatprep.subr.mxu0 0.0
    %106 = vmatpush1.msra.mxu0 0.0
    %107 = vmatprep.subr.mxu0 0.0
    %108 = vmatpush1.msra.mxu0 0.0
    %109 = vmatprep.subr.mxu0 0.0
    %110 = vmatpush1.msra.mxu0 0.0
    %111 = vmatprep.subr.mxu0 0.0
    %112 = vmatpush1.msra.mxu0 0.0
    %113 = vmatprep.subr.mxu0 0.0
    %114 = vmatpush1.msra.mxu0 0.0
    %115 = vmatprep.subr.mxu0 0.0
    %116 = vmatpush1.msra.mxu0 0.0
    %117 = vmatprep.subr.mxu0 0.0
    %118 = vmatpush1.msra.mxu0 0.0
    %119 = vmatprep.subr.mxu0 0.0
    %120 = vmatpush1.msra.mxu0 0.0
    %121 = vmatprep.subr.mxu0 0.0
    %122 = vmatpush1.msra.mxu0 0.0
    %123 = vmatprep.subr.mxu0 0.0
    %124 = vmatpush1.msra.mxu0 0.0
    %125 = vmatprep.subr.mxu0 0.0
    %126 = vmatpush1.msra.mxu0 0.0
    %127 = vmatprep.subr.mxu0 0.0
    %128 = vmatpush1.msra.mxu0 0.0
    %129 = vmatprep.subr.mxu0 0.0
    %130 = vmatpush1.msra.mxu0 0.0
    %131 = vmatprep.subr.mxu0 0.0
    %132 = vmatpush1.msra.mxu0 0.0
    %133 = vmatprep.subr.mxu0 0.0
    %134 = vmatpush1.msra.mxu0 0.0
    %135 = vmatprep.subr.mxu0 0.0
    %136 = vmatpush1.msra.mxu0 0.0
    %137 = vmatprep.subr.mxu0 0.0
    %138 = vmatpush1.msra.mxu0 0.0
    %139 = vmatprep.subr.mxu0 0.0
    %140 = vmatpush1.msra.mxu0 0.0
    %141 = vmatprep.subr.mxu0 0.0
    %142 = vmatpush1.msra.mxu0 0.0
    %143 = vmatprep.subr.mxu0 0.0
    %144 = vmatpush1.msra.mxu0 0.0
    %145 = vmatprep.subr.mxu0 0.0
    %146 = vmatpush1.msra.mxu0 0.0
    %147 = vmatprep.subr.mxu0 0.0
    %148 = vmatpush1.msra.mxu0 0.0
    %149 = vmatprep.subr.mxu0 0.0
    %150 = vmatpush1.msra.mxu0 0.0
    %151 = vmatprep.subr.mxu0 0.0
    %152 = vmatpush1.msra.mxu0 0.0
    %153 = vmatprep.subr.mxu0 0.0
    %154 = vmatpush1.msra.mxu0 0.0
    %155 = vmatprep.subr.mxu0 0.0
    %156 = vmatpush1.msra.mxu0 0.0
    %157 = vmatprep.subr.mxu0 0.0
    %158 = vmatpush1.msra.mxu0 0.0
    %159 = vmatprep.subr.mxu0 0.0
    %160 = vmatpush1.msra.mxu0 0.0
    %161 = vmatprep.mubr.f32.mxu0 0.0
    %162 = vmatmul.mubr.f32.gmra.mrb[0].mxu0 %v92
    %v163 = vpop.f32.mrb[0].mxu0
    %v164 = vadd.f32 0.0, %v163
    %v165 = vpop.f32.mrb[0].mxu0
    %v166 = vadd.f32 0.0, %v165
    %167 = vmatprep.mubr.f32.mxu0 0.0
    %168 = vmatmul.mubr.f32.gmra.mrb[0].mxu0 %v95
    %v169 = vpop.f32.mrb[0].mxu0
    %v170 = vadd.f32 0.0, %v169
    %v171 = vpop.f32.mrb[0].mxu0
    %v172 = vadd.f32 0.0, %v171
    %173 = vdwg.mxu0
    %174 = vmatprep.subr.mxu0 %v81
    %175 = vmatpush1.msra.mxu0 %v80
    %176 = vmatprep.subr.mxu0 %v87
    %177 = vmatpush1.msra.mxu0 %v86
    %178 = vmatprep.subr.mxu0 0.0
    %179 = vmatpush1.msra.mxu0 0.0
    %180 = vmatprep.subr.mxu0 0.0
    %181 = vmatpush1.msra.mxu0 0.0
    %182 = vmatprep.subr.mxu0 0.0
    %183 = vmatpush1.msra.mxu0 0.0
    %184 = vmatprep.subr.mxu0 0.0
    %185 = vmatpush1.msra.mxu0 0.0
    %186 = vmatprep.subr.mxu0 0.0
    %187 = vmatpush1.msra.mxu0 0.0
    %188 = vmatprep.subr.mxu0 0.0
    %189 = vmatpush1.msra.mxu0 0.0
    %190 = vmatprep.subr.mxu0 0.0
    %191 = vmatpush1.msra.mxu0 0.0
    %192 = vmatprep.subr.mxu0 0.0
    %193 = vmatpush1.msra.mxu0 0.0
    %194 = vmatprep.subr.mxu0 0.0
    %195 = vmatpush1.msra.mxu0 0.0
    %196 = vmatprep.subr.mxu0 0.0
    %197 = vmatpush1.msra.mxu0 0.0
    %198 = vmatprep.subr.mxu0 0.0
    %199 = vmatpush1.msra.mxu0 0.0
    %200 = vmatprep.subr.mxu0 0.0
    %201 = vmatpush1.msra.mxu0 0.0
    %202 = vmatprep.subr.mxu0 0.0
    %203 = vmatpush1.msra.mxu0 0.0
    %204 = vmatprep.subr.mxu0 0.0
    %205 = vmatpush1.msra.mxu0 0.0
    %206 = vmatprep.subr.mxu0 0.0
    %207 = vmatpush1.msra.mxu0 0.0
    %208 = vmatprep.subr.mxu0 0.0
    %209 = vmatpush1.msra.mxu0 0.0
    %210 = vmatprep.subr.mxu0 0.0
    %211 = vmatpush1.msra.mxu0 0.0
    %212 = vmatprep.subr.mxu0 0.0
    %213 = vmatpush1.msra.mxu0 0.0
    %214 = vmatprep.subr.mxu0 0.0
    %215 = vmatpush1.msra.mxu0 0.0
    %216 = vmatprep.subr.mxu0 0.0
    %217 = vmatpush1.msra.mxu0 0.0
    %218 = vmatprep.subr.mxu0 0.0
    %219 = vmatpush1.msra.mxu0 0.0
    %220 = vmatprep.subr.mxu0 0.0
    %221 = vmatpush1.msra.mxu0 0.0
    %222 = vmatprep.subr.mxu0 0.0
    %223 = vmatpush1.msra.mxu0 0.0
    %224 = vmatprep.subr.mxu0 0.0
    %225 = vmatpush1.msra.mxu0 0.0
    %226 = vmatprep.subr.mxu0 0.0
    %227 = vmatpush1.msra.mxu0 0.0
    %228 = vmatprep.subr.mxu0 0.0
    %229 = vmatpush1.msra.mxu0 0.0
    %230 = vmatprep.subr.mxu0 0.0
    %231 = vmatpush1.msra.mxu0 0.0
    %232 = vmatprep.subr.mxu0 0.0
    %233 = vmatpush1.msra.mxu0 0.0
    %234 = vmatprep.subr.mxu0 0.0
    %235 = vmatpush1.msra.mxu0 0.0
    %236 = vmatprep.subr.mxu0 0.0
    %237 = vmatpush1.msra.mxu0 0.0
    %238 = vmatprep.mubr.f32.mxu0 0.0
    %239 = vmatmul.mubr.f32.gmra.mrb[0].mxu0 %v92
    %v240 = vpop.f32.mrb[0].mxu0
    %v241 = vadd.f32 0.0, %v240
    %v242 = vpop.f32.mrb[0].mxu0
    %v243 = vadd.f32 0.0, %v242
    %244 = vmatprep.mubr.f32.mxu0 0.0
    %245 = vmatmul.mubr.f32.gmra.mrb[0].mxu0 %v95
    %v246 = vpop.f32.mrb[0].mxu0
    %v247 = vadd.f32 0.0, %v246
    %v248 = vpop.f32.mrb[0].mxu0
    %v249 = vadd.f32 0.0, %v248
    %250 = vdwg.mxu0
    %251 = vmatprep.subr.mxu0 %v83
    %252 = vmatpush1.msra.mxu0 %v82
    %253 = vmatprep.subr.mxu0 %v89
    %254 = vmatpush1.msra.mxu0 %v88
    %255 = vmatprep.subr.mxu0 0.0
    %256 = vmatpush1.msra.mxu0 0.0
    %257 = vmatprep.subr.mxu0 0.0
    %258 = vmatpush1.msra.mxu0 0.0
    %259 = vmatprep.subr.mxu0 0.0
    %260 = vmatpush1.msra.mxu0 0.0
    %261 = vmatprep.subr.mxu0 0.0
    %262 = vmatpush1.msra.mxu0 0.0
    %263 = vmatprep.subr.mxu0 0.0
    %264 = vmatpush1.msra.mxu0 0.0
    %265 = vmatprep.subr.mxu0 0.0
    %266 = vmatpush1.msra.mxu0 0.0
    %267 = vmatprep.subr.mxu0 0.0
    %268 = vmatpush1.msra.mxu0 0.0
    %269 = vmatprep.subr.mxu0 0.0
    %270 = vmatpush1.msra.mxu0 0.0
    %271 = vmatprep.subr.mxu0 0.0
    %272 = vmatpush1.msra.mxu0 0.0
    %273 = vmatprep.subr.mxu0 0.0
    %274 = vmatpush1.msra.mxu0 0.0
    %275 = vmatprep.subr.mxu0 0.0
    %276 = vmatpush1.msra.mxu0 0.0
    %277 = vmatprep.subr.mxu0 0.0
    %278 = vmatpush1.msra.mxu0 0.0
    %279 = vmatprep.subr.mxu0 0.0
    %280 = vmatpush1.msra.mxu0 0.0
    %281 = vmatprep.subr.mxu0 0.0
    %282 = vmatpush1.msra.mxu0 0.0
    %283 = vmatprep.subr.mxu0 0.0
    %284 = vmatpush1.msra.mxu0 0.0
    %285 = vmatprep.subr.mxu0 0.0
    %286 = vmatpush1.msra.mxu0 0.0
    %287 = vmatprep.subr.mxu0 0.0
    %288 = vmatpush1.msra.mxu0 0.0
    %289 = vmatprep.subr.mxu0 0.0
    %290 = vmatpush1.msra.mxu0 0.0
    %291 = vmatprep.subr.mxu0 0.0
    %292 = vmatpush1.msra.mxu0 0.0
    %293 = vmatprep.subr.mxu0 0.0
    %294 = vmatpush1.msra.mxu0 0.0
    %295 = vmatprep.subr.mxu0 0.0
    %296 = vmatpush1.msra.mxu0 0.0
    %297 = vmatprep.subr.mxu0 0.0
    %298 = vmatpush1.msra.mxu0 0.0
    %299 = vmatprep.subr.mxu0 0.0
    %300 = vmatpush1.msra.mxu0 0.0
    %301 = vmatprep.subr.mxu0 0.0
    %302 = vmatpush1.msra.mxu0 0.0
    %303 = vmatprep.subr.mxu0 0.0
    %304 = vmatpush1.msra.mxu0 0.0
    %305 = vmatprep.subr.mxu0 0.0
    %306 = vmatpush1.msra.mxu0 0.0
    %307 = vmatprep.subr.mxu0 0.0
    %308 = vmatpush1.msra.mxu0 0.0
    %309 = vmatprep.subr.mxu0 0.0
    %310 = vmatpush1.msra.mxu0 0.0
    %311 = vmatprep.subr.mxu0 0.0
    %312 = vmatpush1.msra.mxu0 0.0
    %313 = vmatprep.subr.mxu0 0.0
    %314 = vmatpush1.msra.mxu0 0.0
    %315 = vmatprep.mubr.f32.mxu0 0.0
    %316 = vmatmul.mubr.f32.gmra.mrb[0].mxu0 %v92
    %v317 = vpop.f32.mrb[0].mxu0
    %v318 = vadd.f32 0.0, %v317
    %v319 = vpop.f32.mrb[0].mxu0
    %v320 = vadd.f32 0.0, %v319
    %321 = vmatprep.mubr.f32.mxu0 0.0
    %322 = vmatmul.mubr.f32.gmra.mrb[0].mxu0 %v95
    %v323 = vpop.f32.mrb[0].mxu0
    %v324 = vadd.f32 0.0, %v323
    %v325 = vpop.f32.mrb[0].mxu0
    %v326 = vadd.f32 0.0, %v325
    %327 = vdwg.mxu0
    %v328 = vld [vmem:[#allocation7] sm:$0xff]
    %v329 = vld [vmem:[#allocation7 + $0x8] sm:$0xff]
    %v330 = vld [vmem:[#allocation7 + $0x10] sm:$0xff]
    %v331 = vld [vmem:[#allocation7 + $0x18] sm:$0xff]
    %v332 = vpack.c.bf16 %v330, %v328
    %v333 = vpack.c.bf16 %v331, %v329
    %v334 = vld [vmem:[#allocation5] sm:$0xff]
    %v335 = vld [vmem:[#allocation5 + $0x8] sm:$0xff]
    %v336 = vld [vmem:[#allocation5 + $0x10] sm:$0xff]
    %v337 = vld [vmem:[#allocation5 + $0x18] sm:$0xff]
    %v338 = vld [vmem:[#allocation5 + $0x20] sm:$0xff]
    %v339 = vld [vmem:[#allocation5 + $0x28] sm:$0xff]
    %v340 = vld [vmem:[#allocation5 + $0x30] sm:$0xff]
    %v341 = vld [vmem:[#allocation5 + $0x38] sm:$0xff]
    %v342 = vld [vmem:[#allocation5 + $0x40] sm:$0xff]
    %v343 = vld [vmem:[#allocation5 + $0x48] sm:$0xff]
    %v344 = vld [vmem:[#allocation5 + $0x50] sm:$0xff]
    %v345 = vld [vmem:[#allocation5 + $0x58] sm:$0xff]
    %v346 = vld [vmem:[#allocation5 + $0x60] sm:$0xff]
    %v347 = vld [vmem:[#allocation5 + $0x68] sm:$0xff]
    %v348 = vld [vmem:[#allocation5 + $0x70] sm:$0xff]
    %v349 = vld [vmem:[#allocation5 + $0x78] sm:$0xff]
    %v350 = vld [vmem:[#allocation5 + $0x80] sm:$0xff]
    %v351 = vld [vmem:[#allocation5 + $0x88] sm:$0xff]
    %v352 = vld [vmem:[#allocation5 + $0x90] sm:$0xff]
    %v353 = vld [vmem:[#allocation5 + $0x98] sm:$0xff]
    %v354 = vld [vmem:[#allocation5 + $0xa0] sm:$0xff]
    %v355 = vld [vmem:[#allocation5 + $0xa8] sm:$0xff]
    %v356 = vld [vmem:[#allocation5 + $0xb0] sm:$0xff]
    %v357 = vld [vmem:[#allocation5 + $0xb8] sm:$0xff]
    %v358 = vld [vmem:[#allocation5 + $0xc0] sm:$0xff]
    %v359 = vld [vmem:[#allocation5 + $0xc8] sm:$0xff]
    %v360 = vld [vmem:[#allocation5 + $0xd0] sm:$0xff]
    %v361 = vld [vmem:[#allocation5 + $0xd8] sm:$0xff]
    %v362 = vld [vmem:[#allocation5 + $0xe0] sm:$0xff]
    %v363 = vld [vmem:[#allocation5 + $0xe8] sm:$0xff]
    %v364 = vld [vmem:[#allocation5 + $0xf0] sm:$0xff]
    %v365 = vld [vmem:[#allocation5 + $0xf8] sm:$0xff]
    %v366 = vld [vmem:[#allocation5 + $0x100] sm:$0xff]
    %v367 = vld [vmem:[#allocation5 + $0x108] sm:$0xff]
    %v368 = vld [vmem:[#allocation5 + $0x110] sm:$0xff]
    %v369 = vld [vmem:[#allocation5 + $0x118] sm:$0xff]
    %v370 = vld [vmem:[#allocation5 + $0x120] sm:$0xff]
    %v371 = vld [vmem:[#allocation5 + $0x128] sm:$0xff]
    %v372 = vld [vmem:[#allocation5 + $0x130] sm:$0xff]
    %v373 = vld [vmem:[#allocation5 + $0x138] sm:$0xff]
    %v374 = vld [vmem:[#allocation5 + $0x140] sm:$0xff]
    %v375 = vld [vmem:[#allocation5 + $0x148] sm:$0xff]
    %v376 = vld [vmem:[#allocation5 + $0x150] sm:$0xff]
    %v377 = vld [vmem:[#allocation5 + $0x158] sm:$0xff]
    %v378 = vld [vmem:[#allocation5 + $0x160] sm:$0xff]
    %v379 = vld [vmem:[#allocation5 + $0x168] sm:$0xff]
    %v380 = vld [vmem:[#allocation5 + $0x170] sm:$0xff]
    %v381 = vld [vmem:[#allocation5 + $0x178] sm:$0xff]
    %v382 = vld [vmem:[#allocation5 + $0x180] sm:$0xff]
    %v383 = vld [vmem:[#allocation5 + $0x188] sm:$0xff]
    %v384 = vld [vmem:[#allocation5 + $0x190] sm:$0xff]
    %v385 = vld [vmem:[#allocation5 + $0x198] sm:$0xff]
    %v386 = vld [vmem:[#allocation5 + $0x1a0] sm:$0xff]
    %v387 = vld [vmem:[#allocation5 + $0x1a8] sm:$0xff]
    %v388 = vld [vmem:[#allocation5 + $0x1b0] sm:$0xff]
    %v389 = vld [vmem:[#allocation5 + $0x1b8] sm:$0xff]
    %v390 = vld [vmem:[#allocation5 + $0x1c0] sm:$0xff]
    %v391 = vld [vmem:[#allocation5 + $0x1c8] sm:$0xff]
    %v392 = vld [vmem:[#allocation5 + $0x1d0] sm:$0xff]
    %v393 = vld [vmem:[#allocation5 + $0x1d8] sm:$0xff]
    %v394 = vld [vmem:[#allocation5 + $0x1e0] sm:$0xff]
    %v395 = vld [vmem:[#allocation5 + $0x1e8] sm:$0xff]
    %v396 = vld [vmem:[#allocation5 + $0x1f0] sm:$0xff]
    %v397 = vld [vmem:[#allocation5 + $0x1f8] sm:$0xff]
    %v398 = vld [vmem:[#allocation5 + $0x200] sm:$0xff]
    %v399 = vld [vmem:[#allocation5 + $0x208] sm:$0xff]
    %v400 = vld [vmem:[#allocation5 + $0x210] sm:$0xff]
    %v401 = vld [vmem:[#allocation5 + $0x218] sm:$0xff]
    %v402 = vld [vmem:[#allocation5 + $0x220] sm:$0xff]
    %v403 = vld [vmem:[#allocation5 + $0x228] sm:$0xff]
    %v404 = vld [vmem:[#allocation5 + $0x230] sm:$0xff]
    %v405 = vld [vmem:[#allocation5 + $0x238] sm:$0xff]
    %v406 = vld [vmem:[#allocation5 + $0x240] sm:$0xff]
    %v407 = vld [vmem:[#allocation5 + $0x248] sm:$0xff]
    %v408 = vld [vmem:[#allocation5 + $0x250] sm:$0xff]
    %v409 = vld [vmem:[#allocation5 + $0x258] sm:$0xff]
    %v410 = vld [vmem:[#allocation5 + $0x260] sm:$0xff]
    %v411 = vld [vmem:[#allocation5 + $0x268] sm:$0xff]
    %v412 = vld [vmem:[#allocation5 + $0x270] sm:$0xff]
    %v413 = vld [vmem:[#allocation5 + $0x278] sm:$0xff]
    %v414 = vld [vmem:[#allocation5 + $0x280] sm:$0xff]
    %v415 = vld [vmem:[#allocation5 + $0x288] sm:$0xff]
    %v416 = vld [vmem:[#allocation5 + $0x290] sm:$0xff]
    %v417 = vld [vmem:[#allocation5 + $0x298] sm:$0xff]
    %v418 = vld [vmem:[#allocation5 + $0x2a0] sm:$0xff]
    %v419 = vld [vmem:[#allocation5 + $0x2a8] sm:$0xff]
    %v420 = vld [vmem:[#allocation5 + $0x2b0] sm:$0xff]
    %v421 = vld [vmem:[#allocation5 + $0x2b8] sm:$0xff]
    %v422 = vld [vmem:[#allocation5 + $0x2c0] sm:$0xff]
    %v423 = vld [vmem:[#allocation5 + $0x2c8] sm:$0xff]
    %v424 = vld [vmem:[#allocation5 + $0x2d0] sm:$0xff]
    %v425 = vld [vmem:[#allocation5 + $0x2d8] sm:$0xff]
    %v426 = vld [vmem:[#allocation5 + $0x2e0] sm:$0xff]
    %v427 = vld [vmem:[#allocation5 + $0x2e8] sm:$0xff]
    %v428 = vld [vmem:[#allocation5 + $0x2f0] sm:$0xff]
    %v429 = vld [vmem:[#allocation5 + $0x2f8] sm:$0xff]
    %v430 = vld [vmem:[%s3] sm:$0x3f]
    %v432 = vlaneseq
    %v433 = vshrl.u32 %v432, 7
    %v434 = vsub.s32 0, %v433
    %v435 = vrot.slane %v430, %v434
    %v436 = vlaneseq
    %v437 = vshrl.u32 %v436, 7
    %v438 = vsub.s32 1, %v437
    %v439 = vrot.slane %v430, %v438
    %v440 = vlaneseq
    %v441 = vshrl.u32 %v440, 7
    %v442 = vsub.s32 2, %v441
    %v443 = vrot.slane %v430, %v442
    %v444 = vlaneseq
    %v445 = vshrl.u32 %v444, 7
    %v446 = vsub.s32 3, %v445
    %v447 = vrot.slane %v430, %v446
    %v448 = vlaneseq
    %v449 = vshrl.u32 %v448, 7
    %v450 = vsub.s32 4, %v449
    %v451 = vrot.slane %v430, %v450
    %v452 = vlaneseq
    %v453 = vshrl.u32 %v452, 7
    %v454 = vsub.s32 5, %v453
    %v455 = vrot.slane %v430, %v454
    %v558 = vunpack.c.l.b16 %v334
    %v559 = vunpack.c.h.b16 %v334
    %v560 = vunpack.c.l.b16 %v335
    %v561 = vunpack.c.h.b16 %v335
    %v562 = vunpack.c.l.b16 %v336
    %v563 = vunpack.c.h.b16 %v336
    %v564 = vunpack.c.l.b16 %v337
    %v565 = vunpack.c.h.b16 %v337
    %v566 = vunpack.c.l.b16 %v338
    %v567 = vunpack.c.h.b16 %v338
    %v568 = vunpack.c.l.b16 %v339
    %v569 = vunpack.c.h.b16 %v339
    %v570 = vunpack.c.l.b16 %v340
    %v571 = vunpack.c.h.b16 %v340
    %v572 = vunpack.c.l.b16 %v341
    %v573 = vunpack.c.h.b16 %v341
    %v574 = vunpack.c.l.b16 %v342
    %v575 = vunpack.c.h.b16 %v342
    %v576 = vunpack.c.l.b16 %v343
    %v577 = vunpack.c.h.b16 %v343
    %v578 = vunpack.c.l.b16 %v344
    %v579 = vunpack.c.h.b16 %v344
    %v580 = vunpack.c.l.b16 %v345
    %v581 = vunpack.c.h.b16 %v345
    %v582 = vunpack.c.l.b16 %v346
    %v583 = vunpack.c.h.b16 %v346
    %v584 = vunpack.c.l.b16 %v347
    %v585 = vunpack.c.h.b16 %v347
    %v586 = vunpack.c.l.b16 %v348
    %v587 = vunpack.c.h.b16 %v348
    %v588 = vunpack.c.l.b16 %v349
    %v589 = vunpack.c.h.b16 %v349
    %v590 = vunpack.c.l.b16 %v350
    %v591 = vunpack.c.h.b16 %v350
    %v592 = vunpack.c.l.b16 %v351
    %v593 = vunpack.c.h.b16 %v351
    %v594 = vunpack.c.l.b16 %v352
    %v595 = vunpack.c.h.b16 %v352
    %v596 = vunpack.c.l.b16 %v353
    %v597 = vunpack.c.h.b16 %v353
    %v598 = vunpack.c.l.b16 %v354
    %v599 = vunpack.c.h.b16 %v354
    %v600 = vunpack.c.l.b16 %v355
    %v601 = vunpack.c.h.b16 %v355
    %v602 = vunpack.c.l.b16 %v356
    %v603 = vunpack.c.h.b16 %v356
    %v604 = vunpack.c.l.b16 %v357
    %v605 = vunpack.c.h.b16 %v357
    %v606 = vunpack.c.l.b16 %v358
    %v607 = vunpack.c.h.b16 %v358
    %v608 = vunpack.c.l.b16 %v359
    %v609 = vunpack.c.h.b16 %v359
    %v610 = vunpack.c.l.b16 %v360
    %v611 = vunpack.c.h.b16 %v360
    %v612 = vunpack.c.l.b16 %v361
    %v613 = vunpack.c.h.b16 %v361
    %v614 = vunpack.c.l.b16 %v362
    %v615 = vunpack.c.h.b16 %v362
    %v616 = vunpack.c.l.b16 %v363
    %v617 = vunpack.c.h.b16 %v363
    %v618 = vunpack.c.l.b16 %v364
    %v619 = vunpack.c.h.b16 %v364
    %v620 = vunpack.c.l.b16 %v365
    %v621 = vunpack.c.h.b16 %v365
    %v622 = vunpack.c.l.b16 %v366
    %v623 = vunpack.c.h.b16 %v366
    %v624 = vunpack.c.l.b16 %v367
    %v625 = vunpack.c.h.b16 %v367
    %v626 = vunpack.c.l.b16 %v368
    %v627 = vunpack.c.h.b16 %v368
    %v628 = vunpack.c.l.b16 %v369
    %v629 = vunpack.c.h.b16 %v369
    %v630 = vunpack.c.l.b16 %v370
    %v631 = vunpack.c.h.b16 %v370
    %v632 = vunpack.c.l.b16 %v371
    %v633 = vunpack.c.h.b16 %v371
    %v634 = vunpack.c.l.b16 %v372
    %v635 = vunpack.c.h.b16 %v372
    %v636 = vunpack.c.l.b16 %v373
    %v637 = vunpack.c.h.b16 %v373
    %v638 = vunpack.c.l.b16 %v374
    %v639 = vunpack.c.h.b16 %v374
    %v640 = vunpack.c.l.b16 %v375
    %v641 = vunpack.c.h.b16 %v375
    %v642 = vunpack.c.l.b16 %v376
    %v643 = vunpack.c.h.b16 %v376
    %v644 = vunpack.c.l.b16 %v377
    %v645 = vunpack.c.h.b16 %v377
    %v646 = vunpack.c.l.b16 %v378
    %v647 = vunpack.c.h.b16 %v378
    %v648 = vunpack.c.l.b16 %v379
    %v649 = vunpack.c.h.b16 %v379
    %v650 = vunpack.c.l.b16 %v380
    %v651 = vunpack.c.h.b16 %v380
    %v652 = vunpack.c.l.b16 %v381
    %v653 = vunpack.c.h.b16 %v381
    %v654 = vunpack.c.l.b16 %v382
    %v655 = vunpack.c.h.b16 %v382
    %v656 = vunpack.c.l.b16 %v383
    %v657 = vunpack.c.h.b16 %v383
    %v658 = vunpack.c.l.b16 %v384
    %v659 = vunpack.c.h.b16 %v384
    %v660 = vunpack.c.l.b16 %v385
    %v661 = vunpack.c.h.b16 %v385
    %v662 = vunpack.c.l.b16 %v386
    %v663 = vunpack.c.h.b16 %v386
    %v664 = vunpack.c.l.b16 %v387
    %v665 = vunpack.c.h.b16 %v387
    %v666 = vunpack.c.l.b16 %v388
    %v667 = vunpack.c.h.b16 %v388
    %v668 = vunpack.c.l.b16 %v389
    %v669 = vunpack.c.h.b16 %v389
    %v670 = vunpack.c.l.b16 %v390
    %v671 = vunpack.c.h.b16 %v390
    %v672 = vunpack.c.l.b16 %v391
    %v673 = vunpack.c.h.b16 %v391
    %v674 = vunpack.c.l.b16 %v392
    %v675 = vunpack.c.h.b16 %v392
    %v676 = vunpack.c.l.b16 %v393
    %v677 = vunpack.c.h.b16 %v393
    %v678 = vunpack.c.l.b16 %v394
    %v679 = vunpack.c.h.b16 %v394
    %v680 = vunpack.c.l.b16 %v395
    %v681 = vunpack.c.h.b16 %v395
    %v682 = vunpack.c.l.b16 %v396
    %v683 = vunpack.c.h.b16 %v396
    %v684 = vunpack.c.l.b16 %v397
    %v685 = vunpack.c.h.b16 %v397
    %v686 = vunpack.c.l.b16 %v398
    %v687 = vunpack.c.h.b16 %v398
    %v688 = vunpack.c.l.b16 %v399
    %v689 = vunpack.c.h.b16 %v399
    %v690 = vunpack.c.l.b16 %v400
    %v691 = vunpack.c.h.b16 %v400
    %v692 = vunpack.c.l.b16 %v401
    %v693 = vunpack.c.h.b16 %v401
    %v694 = vunpack.c.l.b16 %v402
    %v695 = vunpack.c.h.b16 %v402
    %v696 = vunpack.c.l.b16 %v403
    %v697 = vunpack.c.h.b16 %v403
    %v698 = vunpack.c.l.b16 %v404
    %v699 = vunpack.c.h.b16 %v404
    %v700 = vunpack.c.l.b16 %v405
    %v701 = vunpack.c.h.b16 %v405
    %v702 = vunpack.c.l.b16 %v406
    %v703 = vunpack.c.h.b16 %v406
    %v704 = vunpack.c.l.b16 %v407
    %v705 = vunpack.c.h.b16 %v407
    %v706 = vunpack.c.l.b16 %v408
    %v707 = vunpack.c.h.b16 %v408
    %v708 = vunpack.c.l.b16 %v409
    %v709 = vunpack.c.h.b16 %v409
    %v710 = vunpack.c.l.b16 %v410
    %v711 = vunpack.c.h.b16 %v410
    %v712 = vunpack.c.l.b16 %v411
    %v713 = vunpack.c.h.b16 %v411
    %v714 = vunpack.c.l.b16 %v412
    %v715 = vunpack.c.h.b16 %v412
    %v716 = vunpack.c.l.b16 %v413
    %v717 = vunpack.c.h.b16 %v413
    %v718 = vunpack.c.l.b16 %v414
    %v719 = vunpack.c.h.b16 %v414
    %v720 = vunpack.c.l.b16 %v415
    %v721 = vunpack.c.h.b16 %v415
    %v722 = vunpack.c.l.b16 %v416
    %v723 = vunpack.c.h.b16 %v416
    %v724 = vunpack.c.l.b16 %v417
    %v725 = vunpack.c.h.b16 %v417
    %v726 = vunpack.c.l.b16 %v418
    %v727 = vunpack.c.h.b16 %v418
    %v728 = vunpack.c.l.b16 %v419
    %v729 = vunpack.c.h.b16 %v419
    %v730 = vunpack.c.l.b16 %v420
    %v731 = vunpack.c.h.b16 %v420
    %v732 = vunpack.c.l.b16 %v421
    %v733 = vunpack.c.h.b16 %v421
    %v734 = vunpack.c.l.b16 %v422
    %v735 = vunpack.c.h.b16 %v422
    %v736 = vunpack.c.l.b16 %v423
    %v737 = vunpack.c.h.b16 %v423
    %v738 = vunpack.c.l.b16 %v424
    %v739 = vunpack.c.h.b16 %v424
    %v740 = vunpack.c.l.b16 %v425
    %v741 = vunpack.c.h.b16 %v425
    %v742 = vunpack.c.l.b16 %v426
    %v743 = vunpack.c.h.b16 %v426
    %v744 = vunpack.c.l.b16 %v427
    %v745 = vunpack.c.h.b16 %v427
    %v746 = vunpack.c.l.b16 %v428
    %v747 = vunpack.c.h.b16 %v428
    %v748 = vunpack.c.l.b16 %v429
    %v749 = vunpack.c.h.b16 %v429
    %v750 = vpack.c.b16 %v564, %v558
    %v751 = vpack.c.b16 %v565, %v559
    %v752 = vpack.c.b16 %v566, %v560
    %v753 = vpack.c.b16 %v567, %v561
    %v754 = vpack.c.b16 %v568, %v562
    %v755 = vpack.c.b16 %v569, %v563
    %v756 = vpack.c.b16 %v576, %v570
    %v757 = vpack.c.b16 %v577, %v571
    %v758 = vpack.c.b16 %v578, %v572
    %v759 = vpack.c.b16 %v579, %v573
    %v760 = vpack.c.b16 %v580, %v574
    %v761 = vpack.c.b16 %v581, %v575
    %v762 = vpack.c.b16 %v588, %v582
    %v763 = vpack.c.b16 %v589, %v583
    %v764 = vpack.c.b16 %v590, %v584
    %v765 = vpack.c.b16 %v591, %v585
    %v766 = vpack.c.b16 %v592, %v586
    %v767 = vpack.c.b16 %v593, %v587
    %v768 = vpack.c.b16 %v600, %v594
    %v769 = vpack.c.b16 %v601, %v595
    %v770 = vpack.c.b16 %v602, %v596
    %v771 = vpack.c.b16 %v603, %v597
    %v772 = vpack.c.b16 %v604, %v598
    %v773 = vpack.c.b16 %v605, %v599
    %v774 = vpack.c.b16 %v612, %v606
    %v775 = vpack.c.b16 %v613, %v607
    %v776 = vpack.c.b16 %v614, %v608
    %v777 = vpack.c.b16 %v615, %v609
    %v778 = vpack.c.b16 %v616, %v610
    %v779 = vpack.c.b16 %v617, %v611
    %v780 = vpack.c.b16 %v624, %v618
    %v781 = vpack.c.b16 %v625, %v619
    %v782 = vpack.c.b16 %v626, %v620
    %v783 = vpack.c.b16 %v627, %v621
    %v784 = vpack.c.b16 %v628, %v622
    %v785 = vpack.c.b16 %v629, %v623
    %v786 = vpack.c.b16 %v636, %v630
    %v787 = vpack.c.b16 %v637, %v631
    %v788 = vpack.c.b16 %v638, %v632
    %v789 = vpack.c.b16 %v639, %v633
    %v790 = vpack.c.b16 %v640, %v634
    %v791 = vpack.c.b16 %v641, %v635
    %v792 = vpack.c.b16 %v648, %v642
    %v793 = vpack.c.b16 %v649, %v643
    %v794 = vpack.c.b16 %v650, %v644
    %v795 = vpack.c.b16 %v651, %v645
    %v796 = vpack.c.b16 %v652, %v646
    %v797 = vpack.c.b16 %v653, %v647
    %v798 = vpack.c.b16 %v660, %v654
    %v799 = vpack.c.b16 %v661, %v655
    %v800 = vpack.c.b16 %v662, %v656
    %v801 = vpack.c.b16 %v663, %v657
    %v802 = vpack.c.b16 %v664, %v658
    %v803 = vpack.c.b16 %v665, %v659
    %v804 = vpack.c.b16 %v672, %v666
    %v805 = vpack.c.b16 %v673, %v667
    %v806 = vpack.c.b16 %v674, %v668
    %v807 = vpack.c.b16 %v675, %v669
    %v808 = vpack.c.b16 %v676, %v670
    %v809 = vpack.c.b16 %v677, %v671
    %v810 = vpack.c.b16 %v684, %v678
    %v811 = vpack.c.b16 %v685, %v679
    %v812 = vpack.c.b16 %v686, %v680
    %v813 = vpack.c.b16 %v687, %v681
    %v814 = vpack.c.b16 %v688, %v682
    %v815 = vpack.c.b16 %v689, %v683
    %v816 = vpack.c.b16 %v696, %v690
    %v817 = vpack.c.b16 %v697, %v691
    %v818 = vpack.c.b16 %v698, %v692
    %v819 = vpack.c.b16 %v699, %v693
    %v820 = vpack.c.b16 %v700, %v694
    %v821 = vpack.c.b16 %v701, %v695
    %v822 = vpack.c.b16 %v708, %v702
    %v823 = vpack.c.b16 %v709, %v703
    %v824 = vpack.c.b16 %v710, %v704
    %v825 = vpack.c.b16 %v711, %v705
    %v826 = vpack.c.b16 %v712, %v706
    %v827 = vpack.c.b16 %v713, %v707
    %v828 = vpack.c.b16 %v720, %v714
    %v829 = vpack.c.b16 %v721, %v715
    %v830 = vpack.c.b16 %v722, %v716
    %v831 = vpack.c.b16 %v723, %v717
    %v832 = vpack.c.b16 %v724, %v718
    %v833 = vpack.c.b16 %v725, %v719
    %v834 = vpack.c.b16 %v732, %v726
    %v835 = vpack.c.b16 %v733, %v727
    %v836 = vpack.c.b16 %v734, %v728
    %v837 = vpack.c.b16 %v735, %v729
    %v838 = vpack.c.b16 %v736, %v730
    %v839 = vpack.c.b16 %v737, %v731
    %v840 = vpack.c.b16 %v744, %v738
    %v841 = vpack.c.b16 %v745, %v739
    %v842 = vpack.c.b16 %v746, %v740
    %v843 = vpack.c.b16 %v747, %v741
    %v844 = vpack.c.b16 %v748, %v742
    %v845 = vpack.c.b16 %v749, %v743
    %942 = vmatprep.subr.bf16.mxu0 %v751
    %943 = vmatpush1.bf16.msra.mxu0 %v750
    %944 = vmatprep.subr.bf16.mxu0 %v757
    %945 = vmatpush1.bf16.msra.mxu0 %v756
    %946 = vmatprep.subr.bf16.mxu0 %v763
    %947 = vmatpush1.bf16.msra.mxu0 %v762
    %948 = vmatprep.subr.bf16.mxu0 %v769
    %949 = vmatpush1.bf16.msra.mxu0 %v768
    %950 = vmatprep.subr.bf16.mxu0 %v775
    %951 = vmatpush1.bf16.msra.mxu0 %v774
    %952 = vmatprep.subr.bf16.mxu0 %v781
    %953 = vmatpush1.bf16.msra.mxu0 %v780
    %954 = vmatprep.subr.bf16.mxu0 %v787
    %955 = vmatpush1.bf16.msra.mxu0 %v786
    %956 = vmatprep.subr.bf16.mxu0 %v793
    %957 = vmatpush1.bf16.msra.mxu0 %v792
    %958 = vmatprep.subr.bf16.mxu0 %v799
    %959 = vmatpush1.bf16.msra.mxu0 %v798
    %960 = vmatprep.subr.bf16.mxu0 %v805
    %961 = vmatpush1.bf16.msra.mxu0 %v804
    %962 = vmatprep.subr.bf16.mxu0 %v811
    %963 = vmatpush1.bf16.msra.mxu0 %v810
    %964 = vmatprep.subr.bf16.mxu0 %v817
    %965 = vmatpush1.bf16.msra.mxu0 %v816
    %966 = vmatprep.subr.bf16.mxu0 %v823
    %967 = vmatpush1.bf16.msra.mxu0 %v822
    %968 = vmatprep.subr.bf16.mxu0 %v829
    %969 = vmatpush1.bf16.msra.mxu0 %v828
    %970 = vmatprep.subr.bf16.mxu0 %v835
    %971 = vmatpush1.bf16.msra.mxu0 %v834
    %972 = vmatprep.subr.bf16.mxu0 %v841
    %973 = vmatpush1.bf16.msra.mxu0 %v840
    %974 = vmatprep.mubr.bf16.mxu0 %v333
    %975 = vmatmul.mubr.bf16.gmra.mrb[0].mxu0 %v332
    %v976 = vpop.f32.mrb[0].mxu0
    %v977 = vadd.f32 %v435, %v976
    %v978 = vpop.f32.mrb[0].mxu0
    %v979 = vadd.f32 %v439, %v978
    %v980 = vpop.f32.mrb[0].mxu0
    %v981 = vadd.f32 %v435, %v980
    %v982 = vpop.f32.mrb[0].mxu0
    %v983 = vadd.f32 %v439, %v982
    %984 = vdwg.mxu0
    %985 = vmatprep.subr.bf16.mxu0 %v753
    %986 = vmatpush1.bf16.msra.mxu0 %v752
    %987 = vmatprep.subr.bf16.mxu0 %v759
    %988 = vmatpush1.bf16.msra.mxu0 %v758
    %989 = vmatprep.subr.bf16.mxu0 %v765
    %990 = vmatpush1.bf16.msra.mxu0 %v764
    %991 = vmatprep.subr.bf16.mxu0 %v771
    %992 = vmatpush1.bf16.msra.mxu0 %v770
    %993 = vmatprep.subr.bf16.mxu0 %v777
    %994 = vmatpush1.bf16.msra.mxu0 %v776
    %995 = vmatprep.subr.bf16.mxu0 %v783
    %996 = vmatpush1.bf16.msra.mxu0 %v782
    %997 = vmatprep.subr.bf16.mxu0 %v789
    %998 = vmatpush1.bf16.msra.mxu0 %v788
    %999 = vmatprep.subr.bf16.mxu0 %v795
    %1000 = vmatpush1.bf16.msra.mxu0 %v794
    %1001 = vmatprep.subr.bf16.mxu0 %v801
    %1002 = vmatpush1.bf16.msra.mxu0 %v800
    %1003 = vmatprep.subr.bf16.mxu0 %v807
    %1004 = vmatpush1.bf16.msra.mxu0 %v806
    %1005 = vmatprep.subr.bf16.mxu0 %v813
    %1006 = vmatpush1.bf16.msra.mxu0 %v812
    %1007 = vmatprep.subr.bf16.mxu0 %v819
    %1008 = vmatpush1.bf16.msra.mxu0 %v818
    %1009 = vmatprep.subr.bf16.mxu0 %v825
    %1010 = vmatpush1.bf16.msra.mxu0 %v824
    %1011 = vmatprep.subr.bf16.mxu0 %v831
    %1012 = vmatpush1.bf16.msra.mxu0 %v830
    %1013 = vmatprep.subr.bf16.mxu0 %v837
    %1014 = vmatpush1.bf16.msra.mxu0 %v836
    %1015 = vmatprep.subr.bf16.mxu0 %v843
    %1016 = vmatpush1.bf16.msra.mxu0 %v842
    %1017 = vmatprep.mubr.bf16.mxu0 %v333
    %1018 = vmatmul.mubr.bf16.gmra.mrb[0].mxu0 %v332
    %v1019 = vpop.f32.mrb[0].mxu0
    %v1020 = vadd.f32 %v443, %v1019
    %v1021 = vpop.f32.mrb[0].mxu0
    %v1022 = vadd.f32 %v447, %v1021
    %v1023 = vpop.f32.mrb[0].mxu0
    %v1024 = vadd.f32 %v443, %v1023
    %v1025 = vpop.f32.mrb[0].mxu0
    %v1026 = vadd.f32 %v447, %v1025
    %1027 = vdwg.mxu0
    %1028 = vmatprep.subr.bf16.mxu0 %v755
    %1029 = vmatpush1.bf16.msra.mxu0 %v754
    %1030 = vmatprep.subr.bf16.mxu0 %v761
    %1031 = vmatpush1.bf16.msra.mxu0 %v760
    %1032 = vmatprep.subr.bf16.mxu0 %v767
    %1033 = vmatpush1.bf16.msra.mxu0 %v766
    %1034 = vmatprep.subr.bf16.mxu0 %v773
    %1035 = vmatpush1.bf16.msra.mxu0 %v772
    %1036 = vmatprep.subr.bf16.mxu0 %v779
    %1037 = vmatpush1.bf16.msra.mxu0 %v778
    %1038 = vmatprep.subr.bf16.mxu0 %v785
    %1039 = vmatpush1.bf16.msra.mxu0 %v784
    %1040 = vmatprep.subr.bf16.mxu0 %v791
    %1041 = vmatpush1.bf16.msra.mxu0 %v790
    %1042 = vmatprep.subr.bf16.mxu0 %v797
    %1043 = vmatpush1.bf16.msra.mxu0 %v796
    %1044 = vmatprep.subr.bf16.mxu0 %v803
    %1045 = vmatpush1.bf16.msra.mxu0 %v802
    %1046 = vmatprep.subr.bf16.mxu0 %v809
    %1047 = vmatpush1.bf16.msra.mxu0 %v808
    %1048 = vmatprep.subr.bf16.mxu0 %v815
    %1049 = vmatpush1.bf16.msra.mxu0 %v814
    %1050 = vmatprep.subr.bf16.mxu0 %v821
    %1051 = vmatpush1.bf16.msra.mxu0 %v820
    %1052 = vmatprep.subr.bf16.mxu0 %v827
    %1053 = vmatpush1.bf16.msra.mxu0 %v826
    %1054 = vmatprep.subr.bf16.mxu0 %v833
    %1055 = vmatpush1.bf16.msra.mxu0 %v832
    %1056 = vmatprep.subr.bf16.mxu0 %v839
    %1057 = vmatpush1.bf16.msra.mxu0 %v838
    %1058 = vmatprep.subr.bf16.mxu0 %v845
    %1059 = vmatpush1.bf16.msra.mxu0 %v844
    %1060 = vmatprep.mubr.bf16.mxu0 %v333
    %1061 = vmatmul.mubr.bf16.gmra.mrb[0].mxu0 %v332
    %v1062 = vpop.f32.mrb[0].mxu0
    %v1063 = vadd.f32 %v451, %v1062
    %v1064 = vpop.f32.mrb[0].mxu0
    %v1065 = vadd.f32 %v455, %v1064
    %v1066 = vpop.f32.mrb[0].mxu0
    %v1067 = vadd.f32 %v451, %v1066
    %v1068 = vpop.f32.mrb[0].mxu0
    %v1069 = vadd.f32 %v455, %v1068
    %1070 = vdwg.mxu0
    %v1071 = vadd.f32 %v164, %v977
    %v1072 = vadd.f32 %v166, %v979
    %v1073 = vadd.f32 %v170, %v981
    %v1074 = vadd.f32 %v172, %v983
    %v1075 = vxor.u32 %v1071, 2147483648
    %v1076 = vxor.u32 %v1072, 2147483648
    %v1077 = vxor.u32 %v1073, 2147483648
    %v1078 = vxor.u32 %v1074, 2147483648
    %v1079 = vmul.f32 %v1075, 1.442695
    %v1080 = vpow.pop %v1079
    %v1081 = vmul.f32 %v1076, 1.442695
    %v1082 = vpow.pop %v1081
    %v1083 = vmul.f32 %v1077, 1.442695
    %v1084 = vpow.pop %v1083
    %v1085 = vmul.f32 %v1078, 1.442695
    %v1086 = vpow.pop %v1085
    %v1087 = vadd.f32 %v1080, 1.0
    %v1088 = vadd.f32 %v1082, 1.0
    %v1089 = vadd.f32 %v1084, 1.0
    %v1090 = vadd.f32 %v1086, 1.0
    %v1091 = vrcp.pop %v1087
    %v1092 = vmul.f32 1.0, %v1091
    %v1093 = vrcp.pop %v1088
    %v1094 = vmul.f32 1.0, %v1093
    %v1095 = vrcp.pop %v1089
    %v1096 = vmul.f32 1.0, %v1095
    %v1097 = vrcp.pop %v1090
    %v1098 = vmul.f32 1.0, %v1097
    %v1099 = vadd.f32 %v241, %v1020
    %v1100 = vadd.f32 %v243, %v1022
    %v1101 = vadd.f32 %v247, %v1024
    %v1102 = vadd.f32 %v249, %v1026
    %v1103 = vxor.u32 %v1099, 2147483648
    %v1104 = vxor.u32 %v1100, 2147483648
    %v1105 = vxor.u32 %v1101, 2147483648
    %v1106 = vxor.u32 %v1102, 2147483648
    %v1107 = vmul.f32 %v1103, 1.442695
    %v1108 = vpow.pop %v1107
    %v1109 = vmul.f32 %v1104, 1.442695
    %v1110 = vpow.pop %v1109
    %v1111 = vmul.f32 %v1105, 1.442695
    %v1112 = vpow.pop %v1111
    %v1113 = vmul.f32 %v1106, 1.442695
    %v1114 = vpow.pop %v1113
    %v1115 = vadd.f32 %v1108, 1.0
    %v1116 = vadd.f32 %v1110, 1.0
    %v1117 = vadd.f32 %v1112, 1.0
    %v1118 = vadd.f32 %v1114, 1.0
    %v1119 = vrcp.pop %v1115
    %v1120 = vmul.f32 1.0, %v1119
    %v1121 = vrcp.pop %v1116
    %v1122 = vmul.f32 1.0, %v1121
    %v1123 = vrcp.pop %v1117
    %v1124 = vmul.f32 1.0, %v1123
    %v1125 = vrcp.pop %v1118
    %v1126 = vmul.f32 1.0, %v1125
    %v1127 = vmul.f32 %v1092, %v1063
    %v1128 = vmul.f32 %v1094, %v1065
    %v1129 = vmul.f32 %v1096, %v1067
    %v1130 = vmul.f32 %v1098, %v1069
    %v1131 = vadd.f32 %v318, %v1127
    %v1132 = vadd.f32 %v320, %v1128
    %v1133 = vadd.f32 %v324, %v1129
    %v1134 = vadd.f32 %v326, %v1130
    %v1135 = vtanh.pop %v1131
    %v1136 = vtanh.pop %v1132
    %v1137 = vtanh.pop %v1133
    %v1138 = vtanh.pop %v1134
    %v1139 = vsub.f32 1.0, %v1120
    %v1140 = vsub.f32 1.0, %v1122
    %v1141 = vsub.f32 1.0, %v1124
    %v1142 = vsub.f32 1.0, %v1126
    %v1143 = vmul.f32 %v1139, %v1135
    %v1144 = vmul.f32 %v1140, %v1136
    %v1145 = vmul.f32 %v1141, %v1137
    %v1146 = vmul.f32 %v1142, %v1138
    %v1147 = vmul.f32 %v1120, %v328
    %v1148 = vmul.f32 %v1122, %v329
    %v1149 = vmul.f32 %v1124, %v330
    %v1150 = vmul.f32 %v1126, %v331
    %v1151 = vadd.f32 %v1143, %v1147
    %v1152 = vadd.f32 %v1144, %v1148
    %v1153 = vadd.f32 %v1145, %v1149
    %v1154 = vadd.f32 %v1146, %v1150
    %1155 = vst [vmem:[#allocation8] sm:$0xff] %v1151
    %1156 = vst [vmem:[#allocation8 + $0x8] sm:$0xff] %v1152
    %1157 = vst [vmem:[#allocation8 + $0x10] sm:$0xff] %v1153
    %1158 = vst [vmem:[#allocation8 + $0x18] sm:$0xff] %v1154
    // Predicated region
    $region34: #{encoder_step_padded.1} parent=1 // pred_check
      _
    $region35: #{encoder_step_padded.1} parent=1 // pred_check_branch
      %1160 = sbr.rel (0) target = $region37
    $region36: #{encoder_step_padded.1} parent=1 // pred_region
      %s1162 = ssub.s32 512, 512
      %1163 = vsyncadd [#allocation4], %s1162
      %s1164 = sshll.u32 [#allocation8], 4
      %s1165 = int_to_ptr.vmem [resolvable:$true] %s1164
      %1170 = dma.vmem_to_hbm [thread:$0]  %s1165, 512, %s5, [#allocation4], 256, 256, 16
    $region37: #{encoder_step_padded.1} parent=1 // pred_fallthru
      _
    // Predicated region
    $region38: #{encoder_step_padded.1} parent=1 // pred_check
      _
    $region39: #{encoder_step_padded.1} parent=1 // pred_check_branch
      %1172 = sbr.rel (0) target = $region41
    $region40: #{encoder_step_padded.1} parent=1 // pred_region
      %1173 = dma.done [#allocation4], 512
    $region41: #{encoder_step_padded.1} parent=1 // pred_fallthru
      _
    %1174 = vsyncpa [#allocation3], 1
    %1175 = vsyncpa [#allocation6], 1
    %1176 = vsyncpa [#allocation4], 1

</llo_original>
